<compile_context>
chip_gen: v5e
topology: v5e:2x2
jax: 0.10.0
libtpu: 0.0.40
codegen_flags: <defaults>
</compile_context>

<pallas_src>
import functools

import jax
import jax.numpy as jnp
from jax.experimental import pallas as pl
from jax.experimental.pallas import tpu as pltpu


def _se_kernel(x_ref, w1t_ref, w2t_ref, o_ref, *, inv_hw):
    """One grid step: full SE computation for a (TB, C, HW) tile of images."""
    x = x_ref[...]                                                  # (TB, C, HW) native dtype
    # Squeeze: global average pool over the spatial (lane) axis, f32 accumulation.
    pooled = jnp.sum(x, axis=-1, dtype=jnp.float32) * inv_hw        # (TB, C)
    # Excitation: batched fc1 -> ReLU -> fc2 -> sigmoid on the MXU / EUP.
    h = jnp.dot(pooled, w1t_ref[...], preferred_element_type=jnp.float32)   # (TB, Cr)
    h = jnp.maximum(h, 0.0)
    s = jnp.dot(h, w2t_ref[...], preferred_element_type=jnp.float32)        # (TB, C)
    s = jax.nn.sigmoid(s)
    # Scale: per-channel recalibration in the input's native dtype.
    gates = s.astype(x.dtype)                                       # (TB, C)
    o_ref[...] = (x * gates[:, :, None]).astype(o_ref.dtype)


def _round_up(x, m):
    return ((x + m - 1) // m) * m


def _vmem_budget_bytes():
    """Per-generation VMEM budget for this kernel's pipeline."""
    cap = 64 * 1024 * 1024  # conservative fallback (v7x physical VMEM per core)
    get_info = getattr(pltpu, "get_tpu_info", None)
    if get_info is not None:
        try:
            cap = int(getattr(get_info(), "vmem_capacity_bytes", cap)) or cap
        except Exception:
            pass
    # ~60% of physical VMEM, capped at 96 MiB:
    #   v5e/v6e (128 MiB physical) -> ~76 MiB;  v7x (64 MiB physical) -> ~38 MiB.
    return min(int(cap * 0.6), 96 * 1024 * 1024)


def _pick_batch_tile(batch, per_image_vmem_bytes, budget_bytes):
    """Largest batch tile (a divisor of `batch`) whose pipeline fits the budget."""
    # Working set ~= 2 (double buffer) x 2 (in + out) x tile + ~2x tile of
    # in-kernel temporaries  ->  budget / 6 per live tile.
    tb_max = max(1, budget_bytes // (6 * per_image_vmem_bytes))
    if batch >= 16:
        # Keep at least 2 grid steps so megacore chips can split the batch
        # axis across TensorCores.
        tb_max = min(tb_max, (batch + 1) // 2)
    tb = max(1, min(batch, tb_max))
    while batch % tb:
        tb -= 1
    return tb


def se_block(x, w1, w2, *, batch_tile=None):
    """SEBlock forward.  x: (B, C, H, W); w1: (C//r, C); w2: (C, C//r)."""
    B, C, H, W = x.shape
    HW = H * W
    Cr, C_in = w1.shape
    assert C_in == C and w2.shape == (C, Cr)

    itemsize = jnp.dtype(x.dtype).itemsize
    budget = _vmem_budget_bytes()
    # Per-image VMEM footprint, accounting for (8, 128) tile padding of (C, HW).
    per_image = _round_up(C, 8) * _round_up(HW, 128) * itemsize
    tb = batch_tile if batch_tile is not None else _pick_batch_tile(B, per_image, budget)
    assert B % tb == 0, "batch_tile must divide the batch size"
    grid = (B // tb,)

    # Free reshape (row-major merge of trailing dims): H*W on the lane axis.
    x3 = x.reshape(B, C, HW)
    # Pre-transpose the tiny fc weights once in the wrapper so the in-kernel
    # matmuls are plain (TB, C) @ (C, Cr) and (TB, Cr) @ (Cr, C); nn.Linear
    # stores weights as (out_features, in_features).
    w1t = w1.T  # (C, Cr)
    w2t = w2.T  # (Cr, C)

    kernel = functools.partial(_se_kernel, inv_hw=float(1.0 / HW))

    out3 = pl.pallas_call(
        kernel,
        out_shape=jax.ShapeDtypeStruct((B, C, HW), x.dtype),
        grid_spec=pltpu.PrefetchScalarGridSpec(
            num_scalar_prefetch=0,
            grid=grid,
            in_specs=[
                pl.BlockSpec((tb, C, HW), lambda b: (b, 0, 0)),
                # Tiny weights: constant block index -> DMA'd once, the VMEM
                # copy is reused across all grid steps.
                pl.BlockSpec((C, Cr), lambda b: (0, 0)),
                pl.BlockSpec((Cr, C), lambda b: (0, 0)),
            ],
            out_specs=pl.BlockSpec((tb, C, HW), lambda b: (b, 0, 0)),
        ),
        compiler_params=pltpu.CompilerParams(
            dimension_semantics=("parallel",),
            vmem_limit_bytes=int(budget),
        ),
    )(x3, w1t, w2t)
    return out3.reshape(B, C, H, W)


def se_block_ref(x, w1, w2):
    """Pure-JAX reference mirroring the PyTorch forward."""
    y = jnp.mean(x, axis=(2, 3))                 # (B, C)   global avg pool
    y = jnp.maximum(y @ w1.T, 0.0)               # Linear(C -> C/r), ReLU
    y = jax.nn.sigmoid(y @ w2.T)                 # Linear(C/r -> C), Sigmoid
    return x * y[:, :, None, None]


if __name__ == "__main__":
    # Small shapes consistent with the module: in_channels=32, reduction=16.
    B, C, H, W = 2, 32, 8, 8
    reduction = 16
    Cr = C // reduction

    key = jax.random.PRNGKey(0)
    kx, k1, k2 = jax.random.split(key, 3)

    x = jax.random.normal(kx, (B, C, H, W), dtype=jnp.float32)
    # nn.Linear weight layout: (out_features, in_features), bias=False.
    w1 = jax.random.normal(k1, (Cr, C), dtype=jnp.float32) * 0.1
    w2 = jax.random.normal(k2, (C, Cr), dtype=jnp.float32) * 0.1

    ref = se_block_ref(x, w1, w2)

    # Auto-sized batch tile (whole batch in one grid step at these shapes).
    out = jax.block_until_ready(se_block(x, w1, w2))
    assert out.shape == (B, C, H, W)
    assert jnp.allclose(out, ref, atol=2e-5, rtol=2e-5), "mismatch vs reference"

    # Also exercise the multi-step grid path (batch_tile=1 -> grid of 2 steps).
    out_multi = jax.block_until_ready(se_block(x, w1, w2, batch_tile=1))
    assert jnp.allclose(out_multi, ref, atol=2e-5, rtol=2e-5), "mismatch (tiled path)"

    print("KERNEL_OK")
</pallas_src>

<mosaic_0001>
module attributes {stable_mosaic.version = 11 : i64} {
  func.func @_se_kernel(%arg0: i32, %arg1: memref<2x32x64xf32, #tpu.memory_space<vmem>>, %arg2: memref<32x2xf32, #tpu.memory_space<vmem>>, %arg3: memref<2x32xf32, #tpu.memory_space<vmem>>, %arg4: memref<2x32x64xf32, #tpu.memory_space<vmem>>) attributes {dimension_semantics = [#tpu.dimension_semantics<parallel>], iteration_bounds = array<i64: 1>, scalar_prefetch = 0 : i64, scratch_operands = 0 : i64, tpu.core_type = #tpu.core_type<tc>, window_params = [{transform_indices = @transform_0, window_bounds = array<i64: 2, 32, 64>}, {pipeline_mode = #tpu.pipeline_mode<synchronous>, transform_indices = @transform_1, window_bounds = array<i64: 32, 2>}, {pipeline_mode = #tpu.pipeline_mode<synchronous>, transform_indices = @transform_2, window_bounds = array<i64: 2, 32>}, {transform_indices = @transform_3, window_bounds = array<i64: 2, 32, 64>}]} {
    %c0 = arith.constant 0 : index
    %c0_0 = arith.constant 0 : index
    %c0_1 = arith.constant 0 : index
    %0 = vector.load %arg1[%c0, %c0_0, %c0_1] : memref<2x32x64xf32, #tpu.memory_space<vmem>>, vector<2x32x64xf32>
    %cst = arith.constant dense<0.000000e+00> : vector<2x32xf32>
    %1 = vector.multi_reduction <add>, %0, %cst [2] : vector<2x32x64xf32> to vector<2x32xf32>
    %cst_2 = arith.constant 1.562500e-02 : f32
    %2 = vector.broadcast %cst_2 : f32 to vector<2x32xf32>
    %3 = arith.mulf %1, %2 : vector<2x32xf32>
    %c0_3 = arith.constant 0 : index
    %c0_4 = arith.constant 0 : index
    %4 = vector.load %arg2[%c0_3, %c0_4] : memref<32x2xf32, #tpu.memory_space<vmem>>, vector<32x2xf32>
    %cst_5 = arith.constant dense<0.000000e+00> : vector<2x2xf32>
    %5 = tpu.matmul %3, %4, %cst_5 {dimension_numbers = #tpu.dot_dimension_numbers<[1], [0], [0], [1], [0, 0, 1, 1], [], []>} : vector<2x32xf32>, vector<32x2xf32>, vector<2x2xf32> -> vector<2x2xf32>
    %cst_6 = arith.constant 0.000000e+00 : f32
    %6 = vector.broadcast %cst_6 : f32 to vector<2x2xf32>
    %7 = arith.maximumf %5, %6 : vector<2x2xf32>
    %c0_7 = arith.constant 0 : index
    %c0_8 = arith.constant 0 : index
    %8 = vector.load %arg3[%c0_7, %c0_8] : memref<2x32xf32, #tpu.memory_space<vmem>>, vector<2x32xf32>
    %cst_9 = arith.constant dense<0.000000e+00> : vector<2x32xf32>
    %9 = tpu.matmul %7, %8, %cst_9 {dimension_numbers = #tpu.dot_dimension_numbers<[1], [0], [0], [1], [0, 0, 1, 1], [], []>} : vector<2x2xf32>, vector<2x32xf32>, vector<2x32xf32> -> vector<2x32xf32>
    %10 = arith.negf %9 : vector<2x32xf32>
    %11 = math.exp %10 : vector<2x32xf32>
    %cst_10 = arith.constant 1.000000e+00 : f32
    %12 = vector.broadcast %cst_10 : f32 to vector<2x32xf32>
    %13 = arith.addf %12, %11 : vector<2x32xf32>
    %14 = arith.divf %12, %13 : vector<2x32xf32>
    %15 = vector.shape_cast %14 : vector<2x32xf32> to vector<2x32x1xf32>
    %16 = vector.broadcast %15 : vector<2x32x1xf32> to vector<2x32x64xf32>
    %17 = arith.mulf %0, %16 : vector<2x32x64xf32>
    %c0_11 = arith.constant 0 : index
    %c0_12 = arith.constant 0 : index
    %c0_13 = arith.constant 0 : index
    %18 = vector.load %arg4[%c0_11, %c0_12, %c0_13] : memref<2x32x64xf32, #tpu.memory_space<vmem>>, vector<2x32x64xf32>
    tpu.vector_store %arg4[%c0_11, %c0_12, %c0_13], %17 {strides = array<i32>} : memref<2x32x64xf32, #tpu.memory_space<vmem>>, vector<2x32x64xf32>,
    return
  }
  func.func @transform_0(%arg0: i32) -> (i32, i32, i32) {
    %c0_i32 = arith.constant 0 : i32
    %c0_i32_0 = arith.constant 0 : i32
    %c0_i32_1 = arith.constant 0 : i32
    return %arg0, %c0_i32, %c0_i32_0 : i32, i32, i32
  }
  func.func @transform_1(%arg0: i32) -> (i32, i32) {
    %c0_i32 = arith.constant 0 : i32
    %c0_i32_0 = arith.constant 0 : i32
    %c0_i32_1 = arith.constant 0 : i32
    return %c0_i32, %c0_i32_0 : i32, i32
  }
  func.func @transform_2(%arg0: i32) -> (i32, i32) {
    %c0_i32 = arith.constant 0 : i32
    %c0_i32_0 = arith.constant 0 : i32
    %c0_i32_1 = arith.constant 0 : i32
    return %c0_i32, %c0_i32_0 : i32, i32
  }
  func.func @transform_3(%arg0: i32) -> (i32, i32, i32) {
    %c0_i32 = arith.constant 0 : i32
    %c0_i32_0 = arith.constant 0 : i32
    %c0_i32_1 = arith.constant 0 : i32
    return %arg0, %c0_i32, %c0_i32_0 : i32, i32, i32
  }
}

</mosaic_0001>

<llo_original>
// kernel: tpu_custom_call.1
$region0: #{tpu_custom_call.1}
  #allocation0 [shape = 'u32[]', space=smem, size = 0x4, offset = 0x4, fixed_abs, tag = 'smem constant byte address 0x4 - core index']
  #allocation1 [shape = 'u32[72,128]{1,0:T(1,128)}', space=vmem, size = 0x9000, scoped, tag = 'internal scratch']
  %s0 = inlined_call_operand.hbm [shape: f32[2,32,64], index: 0, kind: input, shape index: {}]
  %s1 = inlined_call_operand.vmem [shape: f32[32,2], index: 1, kind: input, shape index: {}]
  %s2 = inlined_call_operand.vmem [shape: f32[2,32], index: 2, kind: input, shape index: {}]
  %s3 = inlined_call_operand.hbm [shape: f32[2,32,64], index: 3, kind: output, shape index: {}]
  %s4 = sld [smem:[#allocation0]]
  $region26: #{tpu_custom_call.1} parent=0
    _
  %s6 = ssub.s32 1, %s4
  %s7 = scalar_select 0, %s6, %s4
  $region1: #{tpu_custom_call.1} parent=0
    #allocation2 [shape = 'u8[32768]{0}', space=vmem, size = 0x8000, scoped, tag = 'input window, operand 0, single buffered']
    #allocation3 [shape = 's32[1]{0}', space=sflag, size = 0x4, scoped, tag = 'scoped memory for tpu_custom_call.1']
    #allocation4 [shape = 's32[1]{0}', space=sflag, size = 0x4, scoped, tag = 'scoped memory for tpu_custom_call.1']
    #allocation5 [shape = 'u8[32768]{0}', space=vmem, size = 0x8000, scoped, tag = 'output window, operand 0, single buffered']
    %8 = vsyncpa [#allocation3], 0
    %9 = vsyncpa [#allocation4], 0
    // Predicated region
    $region2: #{tpu_custom_call.1} parent=1 // pred_check
      _
    $region3: #{tpu_custom_call.1} parent=1 // pred_check_branch
      %11 = sbr.rel (0) target = $region5
    $region4: #{tpu_custom_call.1} parent=1 // pred_region
      %13 = vsyncadd [#allocation3], 0
      %s14 = sshll.u32 %s0, 4
      %s15 = int_to_ptr.hbm [resolvable:$true] %s14
      %s16 = sshll.u32 [#allocation2], 4
      %s17 = int_to_ptr.vmem [resolvable:$true] %s16
      %22 = dma.hbm_to_vmem [thread:$0]  %s15, 1024, %s17, [#allocation3], 128, 128, 8
    $region5: #{tpu_custom_call.1} parent=1 // pred_fallthru
      _
    // Predicated region
    $region6: #{tpu_custom_call.1} parent=1 // pred_check
      _
    $region7: #{tpu_custom_call.1} parent=1 // pred_check_branch
      %24 = sbr.rel (0) target = $region9
    $region8: #{tpu_custom_call.1} parent=1 // pred_region
      _
    $region9: #{tpu_custom_call.1} parent=1 // pred_fallthru
      _
    // Predicated region
    $region10: #{tpu_custom_call.1} parent=1 // pred_check
      _
    $region11: #{tpu_custom_call.1} parent=1 // pred_check_branch
      %26 = sbr.rel (0) target = $region13
    $region12: #{tpu_custom_call.1} parent=1 // pred_region
      _
    $region13: #{tpu_custom_call.1} parent=1 // pred_fallthru
      _
    // Predicated region
    $region14: #{tpu_custom_call.1} parent=1 // pred_check
      _
    $region15: #{tpu_custom_call.1} parent=1 // pred_check_branch
      %28 = sbr.rel (0) target = $region17
    $region16: #{tpu_custom_call.1} parent=1 // pred_region
      %30 = dma.done [#allocation3], 1024
    $region17: #{tpu_custom_call.1} parent=1 // pred_fallthru
      _
    %v31 = vld [vmem:[#allocation2] sm:$0xff]
    %v32 = vld [vmem:[#allocation2 + $0x8] sm:$0xff]
    %v33 = vld [vmem:[#allocation2 + $0x10] sm:$0xff]
    %v34 = vld [vmem:[#allocation2 + $0x18] sm:$0xff]
    %v35 = vld [vmem:[#allocation2 + $0x20] sm:$0xff]
    %v36 = vld [vmem:[#allocation2 + $0x28] sm:$0xff]
    %v37 = vld [vmem:[#allocation2 + $0x30] sm:$0xff]
    %v38 = vld [vmem:[#allocation2 + $0x38] sm:$0xff]
    %vm39 = vcmask 523264
    %v40 = vsel %vm39, %v31, 0.0
    %41 = vadd.xlane.f32.xlu0 %v40
    %v42 = vpop.xlane.xlu0 %41
    %v43 = vsel %vm39, %v32, 0.0
    %44 = vadd.xlane.f32.xlu0 %v43
    %v45 = vpop.xlane.xlu0 %44
    %v46 = vsel %vm39, %v33, 0.0
    %47 = vadd.xlane.f32.xlu0 %v46
    %v48 = vpop.xlane.xlu0 %47
    %v49 = vsel %vm39, %v34, 0.0
    %50 = vadd.xlane.f32.xlu0 %v49
    %v51 = vpop.xlane.xlu0 %50
    %v52 = vsel %vm39, %v35, 0.0
    %53 = vadd.xlane.f32.xlu0 %v52
    %v54 = vpop.xlane.xlu0 %53
    %v55 = vsel %vm39, %v36, 0.0
    %56 = vadd.xlane.f32.xlu0 %v55
    %v57 = vpop.xlane.xlu0 %56
    %v58 = vsel %vm39, %v37, 0.0
    %59 = vadd.xlane.f32.xlu0 %v58
    %v60 = vpop.xlane.xlu0 %59
    %v61 = vsel %vm39, %v38, 0.0
    %62 = vadd.xlane.f32.xlu0 %v61
    %v63 = vpop.xlane.xlu0 %62
    %v64 = vmul.f32 %v42, 0.015625
    %v65 = vmul.f32 %v45, 0.015625
    %v66 = vmul.f32 %v48, 0.015625
    %v67 = vmul.f32 %v51, 0.015625
    %v68 = vmul.f32 %v54, 0.015625
    %v69 = vmul.f32 %v57, 0.015625
    %v70 = vmul.f32 %v60, 0.015625
    %v71 = vmul.f32 %v63, 0.015625
    %v72 = vld [vmem:[%s1] sm:$0xff]
    %v73 = vld [vmem:[%s1 + $0x8] sm:$0xff]
    %v74 = vld [vmem:[%s1 + $0x10] sm:$0xff]
    %v75 = vld [vmem:[%s1 + $0x18] sm:$0xff]
    %v84 = vlaneseq
    %v85 = vand.u32 %v84, 127
    %v86 = vperm.slane %v64, %v85
    %v87 = vadd.s32 %v85, 4294967288
    %v88 = vperm.slane %v65, %v87
    %vm89 = vcmask 130112
    %v90 = vsel %vm89, %v88, %v86
    %v91 = vadd.s32 %v85, 4294967280
    %v92 = vperm.slane %v66, %v91
    %vm93 = vcmask 195712
    %v94 = vsel %vm93, %v92, %v90
    %v95 = vadd.s32 %v85, 4294967272
    %v96 = vperm.slane %v67, %v95
    %vm97 = vcmask 261312
    %v98 = vsel %vm97, %v96, %v94
    %v99 = vperm.slane %v68, %v85
    %v100 = vperm.slane %v69, %v87
    %v101 = vsel %vm89, %v100, %v99
    %v102 = vperm.slane %v70, %v91
    %v103 = vsel %vm93, %v102, %v101
    %v104 = vperm.slane %v71, %v95
    %v105 = vsel %vm97, %v104, %v103
    %vm106 = vcmask 1041409
    %v107 = vsel %vm106, %v105, %v98
    %vm108 = vcmask 261120
    %v109 = vsel %vm108, %v107, 0
    %111 = vmatpush.msra.mxu0 0.0
    %112 = vmatpush.msra.mxu0 0.0
    %113 = vmatpush.msra.mxu0 0.0
    %114 = vmatpush.msra.mxu0 0.0
    %115 = vmatpush.msra.mxu0 0.0
    %116 = vmatpush.msra.mxu0 0.0
    %117 = vmatpush.msra.mxu0 0.0
    %118 = vmatpush.msra.mxu0 0.0
    %119 = vmatpush.msra.mxu0 0.0
    %120 = vmatpush.msra.mxu0 0.0
    %121 = vmatpush.msra.mxu0 0.0
    %122 = vmatpush.msra.mxu0 0.0
    %123 = vmatpush.msra.mxu0 %v75
    %124 = vmatpush.msra.mxu0 %v74
    %125 = vmatpush.msra.mxu0 %v73
    %126 = vmatpush.msra.mxu0 %v72
    %127 = vmatmul.f32.gmra.mxu0 %v109
    %v128 = vpop.f32.mrf.mxu0
    %v129 = vadd.f32 0.0, %v128
    %130 = vdwg.mxu0
    %v131 = vmax.f32 %v129, 0.0
    %v132 = vld [vmem:[%s2] sm:$0x3]
    %vm133 = vcmask 15360
    %v135 = vsel %vm133, %v131, 0
    %vm137 = vcmask 1041408
    %v139 = vsel %vm137, %v132, 0
    %141 = vmatpush.msra.mxu0 0.0
    %142 = vmatpush.msra.mxu0 0.0
    %143 = vmatpush.msra.mxu0 0.0
    %144 = vmatpush.msra.mxu0 0.0
    %145 = vmatpush.msra.mxu0 0.0
    %146 = vmatpush.msra.mxu0 0.0
    %147 = vmatpush.msra.mxu0 0.0
    %148 = vmatpush.msra.mxu0 0.0
    %149 = vmatpush.msra.mxu0 0.0
    %150 = vmatpush.msra.mxu0 0.0
    %151 = vmatpush.msra.mxu0 0.0
    %152 = vmatpush.msra.mxu0 0.0
    %153 = vmatpush.msra.mxu0 0.0
    %154 = vmatpush.msra.mxu0 0.0
    %155 = vmatpush.msra.mxu0 0.0
    %156 = vmatpush.msra.mxu0 %v139
    %157 = vmatmul.f32.gmra.mxu0 %v135
    %v158 = vpop.f32.mrf.mxu0
    %v159 = vadd.f32 0.0, %v158
    %160 = vdwg.mxu0
    %v161 = vxor.u32 %v159, 2147483648
    %v162 = vmul.f32 %v161, 1.442695
    %v163 = vpow.pop %v162
    %v164 = vadd.f32 %v163, 1.0
    %v165 = vrcp.pop %v164
    %v166 = vmul.f32 %v164, %v165
    %v167 = vsub.f32 1.0, %v166
    %v168 = vmul.f32 %v165, %v167
    %v169 = vadd.f32 %v165, %v168
    %vm170 = vweird.f32 %v164
    %vm171 = vweird.f32 %v165
    %vm172 = vmor %vm170, %vm171
    %v173 = vsel %vm172, %v165, %v169
    %v174 = vand.u32 2147483647, %v164
    %vm175 = vcmp.eq.f32.partialorder %v174, 8.507059e+37
    %v176 = vand.u32 %v164, 2147483648
    %v177 = vor.u32 1.1754944e-38, %v176
    %v178 = vsel %vm175, %v177, %v173
    %v179 = vmul.f32 1.0, %v178
    %v180 = vperm.slane %v179, 0
    %v181 = vlaneseq
    %v182 = vshrl.u32 %v181, 7
    %184 = vset.pattern.permute.xlu0 %v182
    %185 = vperm.xlu0 %184, %v180
    %v186 = vpop.permute.xlu0 %185
    %v187 = vlaneseq
    %v188 = vshrl.u32 %v187, 7
    %v189 = vadd.s32 %v188, 8
    %190 = vset.pattern.permute.xlu0 %v189
    %191 = vperm.xlu0 %190, %v180
    %v192 = vpop.permute.xlu0 %191
    %v193 = vlaneseq
    %v194 = vshrl.u32 %v193, 7
    %v195 = vadd.s32 %v194, 16
    %196 = vset.pattern.permute.xlu0 %v195
    %197 = vperm.xlu0 %196, %v180
    %v198 = vpop.permute.xlu0 %197
    %v199 = vlaneseq
    %v200 = vshrl.u32 %v199, 7
    %v201 = vadd.s32 %v200, 24
    %202 = vset.pattern.permute.xlu0 %v201
    %203 = vperm.xlu0 %202, %v180
    %v204 = vpop.permute.xlu0 %203
    %v205 = vperm.slane %v179, 1
    %v206 = vlaneseq
    %v207 = vshrl.u32 %v206, 7
    %209 = vset.pattern.permute.xlu0 %v207
    %210 = vperm.xlu0 %209, %v205
    %v211 = vpop.permute.xlu0 %210
    %v212 = vlaneseq
    %v213 = vshrl.u32 %v212, 7
    %v214 = vadd.s32 %v213, 8
    %215 = vset.pattern.permute.xlu0 %v214
    %216 = vperm.xlu0 %215, %v205
    %v217 = vpop.permute.xlu0 %216
    %v218 = vlaneseq
    %v219 = vshrl.u32 %v218, 7
    %v220 = vadd.s32 %v219, 16
    %221 = vset.pattern.permute.xlu0 %v220
    %222 = vperm.xlu0 %221, %v205
    %v223 = vpop.permute.xlu0 %222
    %v224 = vlaneseq
    %v225 = vshrl.u32 %v224, 7
    %v226 = vadd.s32 %v225, 24
    %227 = vset.pattern.permute.xlu0 %v226
    %228 = vperm.xlu0 %227, %v205
    %v229 = vpop.permute.xlu0 %228
    %v230 = vmul.f32 %v31, %v186
    %v231 = vmul.f32 %v32, %v192
    %v232 = vmul.f32 %v33, %v198
    %v233 = vmul.f32 %v34, %v204
    %v234 = vmul.f32 %v35, %v211
    %v235 = vmul.f32 %v36, %v217
    %v236 = vmul.f32 %v37, %v223
    %v237 = vmul.f32 %v38, %v229
    %238 = vst.msk [vmem:[#allocation5] sm:$0xff] %vm39, %v230
    %239 = vst.msk [vmem:[#allocation5 + $0x8] sm:$0xff] %vm39, %v231
    %240 = vst.msk [vmem:[#allocation5 + $0x10] sm:$0xff] %vm39, %v232
    %241 = vst.msk [vmem:[#allocation5 + $0x18] sm:$0xff] %vm39, %v233
    %242 = vst.msk [vmem:[#allocation5 + $0x20] sm:$0xff] %vm39, %v234
    %243 = vst.msk [vmem:[#allocation5 + $0x28] sm:$0xff] %vm39, %v235
    %244 = vst.msk [vmem:[#allocation5 + $0x30] sm:$0xff] %vm39, %v236
    %245 = vst.msk [vmem:[#allocation5 + $0x38] sm:$0xff] %vm39, %v237
    // Predicated region
    $region18: #{tpu_custom_call.1} parent=1 // pred_check
      _
    $region19: #{tpu_custom_call.1} parent=1 // pred_check_branch
      %247 = sbr.rel (0) target = $region21
    $region20: #{tpu_custom_call.1} parent=1 // pred_region
      %249 = vsyncadd [#allocation4], 0
      %s250 = sshll.u32 [#allocation5], 4
      %s251 = int_to_ptr.vmem [resolvable:$true] %s250
      %s252 = sshll.u32 %s3, 4
      %s253 = int_to_ptr.hbm [resolvable:$true] %s252
      %258 = dma.vmem_to_hbm [thread:$0]  %s251, 1024, %s253, [#allocation4], 128, 128, 8
    $region21: #{tpu_custom_call.1} parent=1 // pred_fallthru
      _
    // Predicated region
    $region22: #{tpu_custom_call.1} parent=1 // pred_check
      _
    $region23: #{tpu_custom_call.1} parent=1 // pred_check_branch
      %260 = sbr.rel (0) target = $region25
    $region24: #{tpu_custom_call.1} parent=1 // pred_region
      %262 = dma.done [#allocation4], 1024
    $region25: #{tpu_custom_call.1} parent=1 // pred_fallthru
      _
    %263 = vsyncpa [#allocation3], 1
    %264 = vsyncpa [#allocation4], 1

</llo_original>
